<compile_context>
chip_gen: v7x
topology: tpu7x:2x2x1
jax: 0.10.0
libtpu: 0.0.40
codegen_flags: <defaults>
</compile_context>

<pallas_src>
import functools

import jax
import jax.numpy as jnp
from jax.experimental import pallas as pl
from jax.experimental.pallas import tpu as pltpu


# -----------------------------------------------------------------------------
# Small helpers (generation-aware VMEM budgets)
# -----------------------------------------------------------------------------
def _round_up(x, m):
    return (x + m - 1) // m * m


def _tpu_vmem_capacity_bytes():
    try:
        info = pltpu.get_tpu_info()
        cap = getattr(info, "vmem_capacity_bytes", None)
        if cap:
            return int(cap)
    except Exception:
        pass
    return 64 << 20  # conservative: v7x per-TensorCore VMEM


def _weight_budget_bytes(vmem_cap):
    # Per-buffer budget for one packed weight block (Pallas double-buffers it).
    return max(4 << 20, vmem_cap // 8)


def _vmem_limit_bytes(buffer_bytes, vmem_cap):
    margin = 4 << 20
    return int(min(int(0.9 * vmem_cap), max(buffer_bytes + margin, 32 << 20)))


def _largest_group(n_models, per_model_bytes, budget_bytes):
    g = 1
    for cand in range(1, n_models + 1):
        if n_models % cand == 0 and cand * per_model_bytes <= budget_bytes:
            g = cand
    return g


def _largest_dtile(d_out_p, n_models, d_in, itemsize, budget_bytes):
    best = 128
    td = 128
    while td <= d_out_p:
        if d_out_p % td == 0 and d_in * n_models * td * itemsize <= budget_bytes:
            best = td
        td += 128
    return best


# -----------------------------------------------------------------------------
# Kernel 1: mean/max — grid over groups of G models, one matmul per step
# -----------------------------------------------------------------------------
def _ensemble_group_kernel(x_ref, w_ref, b_ref, o_ref, *maybe_acc, mode, group,
                           n_models, d_out_p, acc_is_out):
    acc_ref = o_ref if acc_is_out else maybe_acc[0]
    s = pl.program_id(0)
    last = pl.num_programs(0) - 1

    # One lane-dense MXU matmul for the whole group of models.
    y = jnp.dot(x_ref[...], w_ref[...], preferred_element_type=jnp.float32)
    y = y + b_ref[...].astype(jnp.float32)          # (B, group*d_out_p)

    # Reduce the G per-model slices (lane-aligned: d_out_p % 128 == 0).
    part = y[:, 0:d_out_p]
    for j in range(1, group):
        yj = y[:, j * d_out_p:(j + 1) * d_out_p]
        part = (part + yj) if mode == "mean" else jnp.maximum(part, yj)

    # First step writes the (resident) accumulator directly; no init pass.
    @pl.when(s == 0)
    def _():
        acc_ref[...] = part.astype(acc_ref.dtype)

    @pl.when(s != 0)
    def _():
        if mode == "mean":
            acc_ref[...] = acc_ref[...] + part.astype(acc_ref.dtype)
        else:
            acc_ref[...] = jnp.maximum(acc_ref[...], part.astype(acc_ref.dtype))

    if mode == "mean":
        @pl.when(s == last)
        def _():
            o_ref[...] = (acc_ref[...].astype(jnp.float32)
                          * (1.0 / n_models)).astype(o_ref.dtype)
    elif not acc_is_out:
        @pl.when(s == last)
        def _():
            o_ref[...] = acc_ref[...].astype(o_ref.dtype)


# -----------------------------------------------------------------------------
# Kernel 2: median — grid over D_out tiles, all M models resident per tile
# -----------------------------------------------------------------------------
def _ensemble_median_kernel(x_ref, w_ref, b_ref, o_ref, *, n_models, d_tile):
    y = jnp.dot(x_ref[...], w_ref[...], preferred_element_type=jnp.float32)
    y = y + b_ref[...].astype(jnp.float32)          # (B, M*d_tile)

    k = (n_models - 1) // 2            # torch.median: lower of the two middles
    passes = n_models - k              # bubble passes needed to settle index k

    # Process 128-lane chunks so at most ~M tiles are live at once.
    for c in range(d_tile // 128):
        lo, hi = c * 128, (c + 1) * 128
        vals = [y[:, m * d_tile + lo:m * d_tile + hi] for m in range(n_models)]
        # TODO(synk): for large M replace with a Batcher odd-even selection
        # network (O(M log^2 M) compare-exchanges).
        for i in range(passes):
            for j in range(n_models - 1 - i):
                a, b = vals[j], vals[j + 1]
                vals[j], vals[j + 1] = jnp.minimum(a, b), jnp.maximum(a, b)
        o_ref[:, lo:hi] = vals[k].astype(o_ref.dtype)


# -----------------------------------------------------------------------------
# Setup-time packing (hoist repack / casts out of the per-call path)
# -----------------------------------------------------------------------------
def pack_ensemble_params(weights, biases, mode="mean", *, compute_dtype=None,
                         group=None, d_tile=None):
    """Pack (M, D_in, D_out) weights / (M, 1, D_out) biases once, at setup."""
    if mode not in ("mean", "max", "median"):
        raise ValueError(f'Unknown mode "{mode}"')
    M, D_in, D_out = weights.shape
    Dp = _round_up(D_out, 128)

    w = weights.astype(compute_dtype) if compute_dtype is not None else weights
    b = biases.reshape(M, D_out).astype(jnp.float32)
    if Dp != D_out:
        w = jnp.pad(w, ((0, 0), (0, 0), (0, Dp - D_out)))
        b = jnp.pad(b, ((0, 0), (0, Dp - D_out)))

    itemsize = jnp.dtype(w.dtype).itemsize
    vmem_cap = _tpu_vmem_capacity_bytes()
    budget = _weight_budget_bytes(vmem_cap)

    packed = dict(mode=mode, M=M, D_in=D_in, D_out=D_out, Dp=Dp)

    if mode in ("mean", "max"):
        if group is None:
            group = _largest_group(M, D_in * Dp * itemsize, budget)
        assert M % group == 0, "group must divide the number of models"
        n_steps = M // group
        # (M, D_in, Dp) -> (n_steps, D_in, group*Dp), group-major within a step.
        w_p = (w.reshape(n_steps, group, D_in, Dp)
                .transpose(0, 2, 1, 3)
                .reshape(n_steps, D_in, group * Dp))
        b_p = b.reshape(n_steps, 1, group * Dp)
        packed.update(w=w_p, b=b_p, group=group, n_steps=n_steps)
    else:  # median
        if d_tile is None:
            d_tile = _largest_dtile(Dp, M, D_in, itemsize, budget)
        assert d_tile % 128 == 0 and Dp % d_tile == 0
        n_tiles = Dp // d_tile
        # (M, D_in, Dp) -> (n_tiles, D_in, M*d_tile), model-major within a tile.
        w_p = (w.reshape(M, D_in, n_tiles, d_tile)
                .transpose(2, 1, 0, 3)
                .reshape(n_tiles, D_in, M * d_tile))
        b_p = (b.reshape(M, n_tiles, d_tile)
                .transpose(1, 0, 2)
                .reshape(n_tiles, 1, M * d_tile))
        packed.update(w=w_p, b=b_p, d_tile=d_tile, n_tiles=n_tiles)
    return packed


# -----------------------------------------------------------------------------
# Per-call path (no weight repacking; single kernel launch)
# -----------------------------------------------------------------------------
def ensemble_predict_packed(x, packed):
    mode = packed["mode"]
    M, D_in, D_out, Dp = packed["M"], packed["D_in"], packed["D_out"], packed["Dp"]
    w, b = packed["w"], packed["b"]
    B = x.shape[0]
    out_dtype = x.dtype
    if x.dtype != w.dtype:
        x = x.astype(w.dtype)

    vmem_cap = _tpu_vmem_capacity_bytes()
    wd = jnp.dtype(w.dtype).itemsize
    od = jnp.dtype(out_dtype).itemsize

    if mode in ("mean", "max"):
        group, n_steps = packed["group"], packed["n_steps"]
        acc_is_out = (out_dtype == jnp.float32)
        scratch = [] if acc_is_out else [pltpu.VMEM((B, Dp), jnp.float32)]
        kernel = functools.partial(_ensemble_group_kernel, mode=mode, group=group,
                                   n_models=M, d_out_p=Dp, acc_is_out=acc_is_out)
        # 2x for Pallas input/output double-buffering + f32 accumulator.
        buf_bytes = 2 * (B * D_in * wd + D_in * group * Dp * wd
                         + group * Dp * 4 + B * Dp * od) + B * Dp * 4
        out_p = pl.pallas_call(
            kernel,
            out_shape=jax.ShapeDtypeStruct((B, Dp), out_dtype),
            grid_spec=pltpu.PrefetchScalarGridSpec(
                num_scalar_prefetch=0,
                grid=(n_steps,),
                in_specs=[
                    pl.BlockSpec((B, D_in), lambda s: (0, 0)),              # x (resident)
                    pl.BlockSpec((pl.Squeezed(), D_in, group * Dp),
                                 lambda s: (s, 0, 0)),                      # W group
                    pl.BlockSpec((pl.Squeezed(), 1, group * Dp),
                                 lambda s: (s, 0, 0)),                      # b group
                ],
                out_specs=pl.BlockSpec((B, Dp), lambda s: (0, 0)),
                scratch_shapes=scratch,
            ),
            compiler_params=pltpu.CompilerParams(
                dimension_semantics=("arbitrary",),
                vmem_limit_bytes=_vmem_limit_bytes(buf_bytes, vmem_cap),
            ),
        )(x, w, b)
    else:  # median
        d_tile, n_tiles = packed["d_tile"], packed["n_tiles"]
        kernel = functools.partial(_ensemble_median_kernel, n_models=M,
                                   d_tile=d_tile)
        buf_bytes = 2 * (B * D_in * wd + D_in * M * d_tile * wd
                         + M * d_tile * 4 + B * d_tile * od)
        out_p = pl.pallas_call(
            kernel,
            out_shape=jax.ShapeDtypeStruct((B, Dp), out_dtype),
            grid_spec=pltpu.PrefetchScalarGridSpec(
                num_scalar_prefetch=0,
                grid=(n_tiles,),
                in_specs=[
                    pl.BlockSpec((B, D_in), lambda t: (0, 0)),              # x (resident)
                    pl.BlockSpec((pl.Squeezed(), D_in, M * d_tile),
                                 lambda t: (t, 0, 0)),                      # W tile
                    pl.BlockSpec((pl.Squeezed(), 1, M * d_tile),
                                 lambda t: (t, 0, 0)),                      # b tile
                ],
                out_specs=pl.BlockSpec((B, d_tile), lambda t: (0, t)),
                scratch_shapes=[],
            ),
            compiler_params=pltpu.CompilerParams(
                # Independent D_out tiles -> megacore-shardable on v7x.
                dimension_semantics=("parallel",),
                vmem_limit_bytes=_vmem_limit_bytes(buf_bytes, vmem_cap),
            ),
        )(x, w, b)

    return out_p if Dp == D_out else out_p[:, :D_out]


def ensemble_prediction(x, weights, biases, mode="mean", *, compute_dtype=None,
                        group=None, d_tile=None):
    """Convenience wrapper (pack + predict).

    For repeated calls, call pack_ensemble_params(...) ONCE at setup time and
    reuse ensemble_predict_packed(x, packed) so the weight repack / cast never
    lands on the per-call path (it is an extra HBM pass over all weights).
    """
    packed = pack_ensemble_params(weights, biases, mode,
                                  compute_dtype=compute_dtype,
                                  group=group, d_tile=d_tile)
    return ensemble_predict_packed(x, packed)


# -----------------------------------------------------------------------------
# Pure-JAX reference (matches the PyTorch EnsemblePrediction semantics)
# -----------------------------------------------------------------------------
def ensemble_reference(x, weights, biases, mode="mean"):
    Y = jnp.einsum("bi,mio->mbo", x, weights) + biases   # (M, B, D_out)
    if mode == "mean":
        return jnp.mean(Y, axis=0)
    if mode == "max":
        return jnp.max(Y, axis=0)
    if mode == "median":
        # torch.median(dim=0).values = lower of the two middle values (even M).
        return jnp.sort(Y, axis=0)[(Y.shape[0] - 1) // 2]
    raise ValueError(mode)


def _check(name, out, ref, atol, rtol):
    out32 = jnp.asarray(out, jnp.float32)
    ref32 = jnp.asarray(ref, jnp.float32)
    if bool(jnp.allclose(out32, ref32, atol=atol, rtol=rtol)):
        return True
    print(f"{name}: MISMATCH max err = {float(jnp.max(jnp.abs(out32 - ref32)))}")
    return False


if __name__ == "__main__":
    key = jax.random.PRNGKey(0)
    k_x, k_w, k_b, k_w2, k_b2 = jax.random.split(key, 5)

    M = 4        # number of ensemble members
    B = 8        # batch
    D_in = 32    # input features
    D_out = 128  # output responses (n_neurons)

    x = jax.random.normal(k_x, (B, D_in), dtype=jnp.float32)
    weights = 0.1 * jax.random.normal(k_w, (M, D_in, D_out), dtype=jnp.float32)
    biases = 0.1 * jax.random.normal(k_b, (M, 1, D_out), dtype=jnp.float32)

    ok = True

    # 1) Default path, all three reduction modes, f32.
    for mode in ("mean", "max", "median"):
        out = jax.block_until_ready(
            ensemble_prediction(x, weights, biases, mode=mode))
        ref = ensemble_reference(x, weights, biases, mode=mode)
        ok &= _check(f"default mode={mode}", out, ref, 1e-5, 1e-5)

    # 2) Multi-step streaming over model groups (forced group=2).
    for mode in ("mean", "max"):
        out = jax.block_until_ready(
            ensemble_prediction(x, weights, biases, mode=mode, group=2))
        ref = ensemble_reference(x, weights, biases, mode=mode)
        ok &= _check(f"group=2 mode={mode}", out, ref, 1e-5, 1e-5)

    # 3) Median with a multi-tile D_out grid (D_out=256, d_tile=128).
    w256 = 0.1 * jax.random.normal(k_w2, (M, D_in, 256), dtype=jnp.float32)
    b256 = 0.1 * jax.random.normal(k_b2, (M, 1, 256), dtype=jnp.float32)
    out = jax.block_until_ready(
        ensemble_prediction(x, w256, b256, mode="median", d_tile=128))
    ref = ensemble_reference(x, w256, b256, mode="median")
    ok &= _check("median d_tile=128 D_out=256", out, ref, 1e-5, 1e-5)

    # 4) Non-128 D_out (lane padding path), all modes.
    w100 = weights[:, :, :100]
    b100 = biases[:, :, :100]
    for mode in ("mean", "max", "median"):
        out = jax.block_until_ready(
            ensemble_prediction(x, w100, b100, mode=mode))
        ref = ensemble_reference(x, w100, b100, mode=mode)
        ok &= _check(f"D_out=100 mode={mode}", out, ref, 1e-5, 1e-5)

    # 5) bf16 weight/activation compression (f32 MXU accumulation).
    out = jax.block_until_ready(
        ensemble_prediction(x, weights, biases, mode="mean",
                            compute_dtype=jnp.bfloat16))
    ref = ensemble_reference(x, weights, biases, mode="mean")
    ok &= _check("bf16 compute mean", out, ref, 1e-1, 1e-1)

    # 6) bf16 output dtype (f32 scratch accumulator path), 2-step streaming.
    x_bf = x.astype(jnp.bfloat16)
    out = jax.block_until_ready(
        ensemble_prediction(x_bf, weights, biases, mode="mean", group=2))
    ref = ensemble_reference(x_bf.astype(jnp.float32), weights, biases, "mean")
    ok &= _check("bf16 output mean", out, ref, 2e-2, 2e-2)

    if ok:
        print("KERNEL_OK")
</pallas_src>

<mosaic_0001>
module attributes {stable_mosaic.version = 11 : i64} {
  func.func @_ensemble_group_kernel(%arg0: i32, %arg1: memref<8x32xf32, #tpu.memory_space<vmem>>, %arg2: memref<1x32x512xf32, #tpu.memory_space<vmem>>, %arg3: memref<1x1x512xf32, #tpu.memory_space<vmem>>, %arg4: memref<8x128xf32, #tpu.memory_space<vmem>>) attributes {dimension_semantics = [#tpu.dimension_semantics<arbitrary>], iteration_bounds = array<i64: 1>, scalar_prefetch = 0 : i64, scratch_operands = 0 : i64, tpu.core_type = #tpu.core_type<tc>, window_params = [{pipeline_mode = #tpu.pipeline_mode<synchronous>, transform_indices = @transform_0, window_bounds = array<i64: 8, 32>}, {transform_indices = @transform_1, window_bounds = array<i64: 1, 32, 512>}, {transform_indices = @transform_2, window_bounds = array<i64: 1, 1, 512>}, {pipeline_mode = #tpu.pipeline_mode<synchronous>, transform_indices = @transform_3, window_bounds = array<i64: 8, 128>}]} {
    %c0 = arith.constant 0 : index
    %c0_0 = arith.constant 0 : index
    %0 = vector.load %arg1[%c0, %c0_0] : memref<8x32xf32, #tpu.memory_space<vmem>>, vector<8x32xf32>
    %c0_1 = arith.constant 0 : index
    %c0_2 = arith.constant 0 : index
    %c0_3 = arith.constant 0 : index
    %1 = vector.load %arg2[%c0_1, %c0_2, %c0_3] : memref<1x32x512xf32, #tpu.memory_space<vmem>>, vector<1x32x512xf32>
    %2 = vector.shape_cast %1 : vector<1x32x512xf32> to vector<32x512xf32>
    %cst = arith.constant dense<0.000000e+00> : vector<8x512xf32>
    %3 = tpu.matmul %0, %2, %cst {dimension_numbers = #tpu.dot_dimension_numbers<[1], [0], [0], [1], [0, 0, 1, 1], [], []>} : vector<8x32xf32>, vector<32x512xf32>, vector<8x512xf32> -> vector<8x512xf32>
    %c0_4 = arith.constant 0 : index
    %c0_5 = arith.constant 0 : index
    %c0_6 = arith.constant 0 : index
    %4 = vector.load %arg3[%c0_4, %c0_5, %c0_6] : memref<1x1x512xf32, #tpu.memory_space<vmem>>, vector<1x1x512xf32>
    %5 = vector.shape_cast %4 : vector<1x1x512xf32> to vector<1x512xf32>
    %6 = vector.broadcast %5 : vector<1x512xf32> to vector<8x512xf32>
    %7 = arith.addf %3, %6 : vector<8x512xf32>
    %8 = vector.extract_strided_slice %7 {offsets = [0, 0], sizes = [8, 128], strides = [1, 1]} : vector<8x512xf32> to vector<8x128xf32>
    %9 = vector.extract_strided_slice %7 {offsets = [0, 128], sizes = [8, 128], strides = [1, 1]} : vector<8x512xf32> to vector<8x128xf32>
    %10 = arith.addf %8, %9 : vector<8x128xf32>
    %11 = vector.extract_strided_slice %7 {offsets = [0, 256], sizes = [8, 128], strides = [1, 1]} : vector<8x512xf32> to vector<8x128xf32>
    %12 = arith.addf %10, %11 : vector<8x128xf32>
    %13 = vector.extract_strided_slice %7 {offsets = [0, 384], sizes = [8, 128], strides = [1, 1]} : vector<8x512xf32> to vector<8x128xf32>
    %14 = arith.addf %12, %13 : vector<8x128xf32>
    %c0_i32 = arith.constant 0 : i32
    %15 = arith.cmpi eq, %arg0, %c0_i32 : i32
    %16 = arith.extui %15 : i1 to i32
    %c0_i32_7 = arith.constant 0 : i32
    %17 = arith.cmpi ne, %16, %c0_i32_7 : i32
    scf.if %17 {
      %c0_12 = arith.constant 0 : index
      %c0_13 = arith.constant 0 : index
      %24 = vector.load %arg4[%c0_12, %c0_13] : memref<8x128xf32, #tpu.memory_space<vmem>>, vector<8x128xf32>
      tpu.vector_store %arg4[%c0_12, %c0_13], %14 {strides = array<i32>} : memref<8x128xf32, #tpu.memory_space<vmem>>, vector<8x128xf32>,
    } else {
    }
    %c0_i32_8 = arith.constant 0 : i32
    %18 = arith.cmpi ne, %arg0, %c0_i32_8 : i32
    %19 = arith.extui %18 : i1 to i32
    %c0_i32_9 = arith.constant 0 : i32
    %20 = arith.cmpi ne, %19, %c0_i32_9 : i32
    scf.if %20 {
      %c0_12 = arith.constant 0 : index
      %c0_13 = arith.constant 0 : index
      %24 = vector.load %arg4[%c0_12, %c0_13] : memref<8x128xf32, #tpu.memory_space<vmem>>, vector<8x128xf32>
      %25 = arith.addf %24, %14 : vector<8x128xf32>
      %c0_14 = arith.constant 0 : index
      %c0_15 = arith.constant 0 : index
      %26 = vector.load %arg4[%c0_14, %c0_15] : memref<8x128xf32, #tpu.memory_space<vmem>>, vector<8x128xf32>
      tpu.vector_store %arg4[%c0_14, %c0_15], %25 {strides = array<i32>} : memref<8x128xf32, #tpu.memory_space<vmem>>, vector<8x128xf32>,
    } else {
    }
    %c0_i32_10 = arith.constant 0 : i32
    %21 = arith.cmpi eq, %arg0, %c0_i32_10 : i32
    %22 = arith.extui %21 : i1 to i32
    %c0_i32_11 = arith.constant 0 : i32
    %23 = arith.cmpi ne, %22, %c0_i32_11 : i32
    scf.if %23 {
      %c0_12 = arith.constant 0 : index
      %c0_13 = arith.constant 0 : index
      %24 = vector.load %arg4[%c0_12, %c0_13] : memref<8x128xf32, #tpu.memory_space<vmem>>, vector<8x128xf32>
      %cst_14 = arith.constant 2.500000e-01 : f32
      %25 = vector.broadcast %cst_14 : f32 to vector<8x128xf32>
      %26 = arith.mulf %24, %25 : vector<8x128xf32>
      %c0_15 = arith.constant 0 : index
      %c0_16 = arith.constant 0 : index
      %27 = vector.load %arg4[%c0_15, %c0_16] : memref<8x128xf32, #tpu.memory_space<vmem>>, vector<8x128xf32>
      tpu.vector_store %arg4[%c0_15, %c0_16], %26 {strides = array<i32>} : memref<8x128xf32, #tpu.memory_space<vmem>>, vector<8x128xf32>,
    } else {
    }
    return
  }
  func.func @transform_0(%arg0: i32) -> (i32, i32) {
    %c0_i32 = arith.constant 0 : i32
    %c0_i32_0 = arith.constant 0 : i32
    %c0_i32_1 = arith.constant 0 : i32
    return %c0_i32, %c0_i32_0 : i32, i32
  }
  func.func @transform_1(%arg0: i32) -> (i32, i32, i32) {
    %c0_i32 = arith.constant 0 : i32
    %c0_i32_0 = arith.constant 0 : i32
    %c0_i32_1 = arith.constant 0 : i32
    return %arg0, %c0_i32, %c0_i32_0 : i32, i32, i32
  }
  func.func @transform_2(%arg0: i32) -> (i32, i32, i32) {
    %c0_i32 = arith.constant 0 : i32
    %c0_i32_0 = arith.constant 0 : i32
    %c0_i32_1 = arith.constant 0 : i32
    return %arg0, %c0_i32, %c0_i32_0 : i32, i32, i32
  }
  func.func @transform_3(%arg0: i32) -> (i32, i32) {
    %c0_i32 = arith.constant 0 : i32
    %c0_i32_0 = arith.constant 0 : i32
    %c0_i32_1 = arith.constant 0 : i32
    return %c0_i32, %c0_i32_0 : i32, i32
  }
}

</mosaic_0001>

<llo_original>
// kernel: tpu_custom_call.1
$region0: #{tpu_custom_call.1}
  #allocation0 [shape = 'u32[]', space=smem, size = 0x4, offset = 0x4, fixed_abs, tag = 'smem constant byte address 0x4 - core index']
  #allocation1 [shape = 'u32[144,128]{1,0:T(1,128)}', space=vmem, size = 0x12000, scoped, tag = 'internal scratch']
  %s0 = inlined_call_operand.hbm [shape: f32[8,32], index: 0, kind: input, shape index: {}]
  %s1 = inlined_call_operand.hbm [shape: f32[1,32,512], index: 1, kind: input, shape index: {}]
  %s2 = inlined_call_operand.vmem [shape: f32[1,1,512], index: 2, kind: input, shape index: {}]
  %s3 = inlined_call_operand.hbm [shape: f32[8,128], index: 3, kind: output, shape index: {}]
  %s4 = sld [smem:[#allocation0]]
  $region42: #{tpu_custom_call.1} parent=0
    _
  %s6 = ssub.s32 1, %s4
  %s7 = scalar_select 0, %s6, %s4
  $region1: #{tpu_custom_call.1} parent=0
    #allocation2 [shape = 'u8[4096]{0}', space=vmem, size = 0x1000, scoped, tag = 'input window, operand 0, single buffered']
    #allocation3 [shape = 's32[1]{0}', space=sflag, size = 0x4, scoped, tag = 'scoped memory for tpu_custom_call.1']
    #allocation4 [shape = 's32[1]{0}', space=sflag, size = 0x4, scoped, tag = 'scoped memory for tpu_custom_call.1']
    #allocation5 [shape = 'u8[65536]{0}', space=vmem, size = 0x10000, scoped, tag = 'input window, operand 1, single buffered']
    #allocation6 [shape = 's32[1]{0}', space=sflag, size = 0x4, scoped, tag = 'scoped memory for tpu_custom_call.1']
    #allocation7 [shape = 'u8[4096]{0}', space=vmem, size = 0x1000, scoped, tag = 'output window, operand 0, single buffered']
    %8 = vsyncpa [#allocation3], 0
    %9 = vsyncpa [#allocation6], 0
    %10 = vsyncpa [#allocation4], 0
    // Predicated region
    $region2: #{tpu_custom_call.1} parent=1 // pred_check
      _
    $region3: #{tpu_custom_call.1} parent=1 // pred_check_branch
      %12 = sbr.rel (0) target = $region5
    $region4: #{tpu_custom_call.1} parent=1 // pred_region
      %s14 = ssub.s32 128, 128
      %15 = vsyncadd [#allocation3], %s14
      %s17 = sshll.u32 [#allocation2], 4
      %s18 = int_to_ptr.vmem [resolvable:$true] %s17
      %20 = dma.hbm_to_vmem [thread:$0]  %s0, 128, %s18, [#allocation3]
    $region5: #{tpu_custom_call.1} parent=1 // pred_fallthru
      _
    // Predicated region
    $region6: #{tpu_custom_call.1} parent=1 // pred_check
      _
    $region7: #{tpu_custom_call.1} parent=1 // pred_check_branch
      %22 = sbr.rel (0) target = $region9
    $region8: #{tpu_custom_call.1} parent=1 // pred_region
      %s24 = ssub.s32 2048, 2048
      %25 = vsyncadd [#allocation6], %s24
      %s26 = sshll.u32 [#allocation5], 4
      %s27 = int_to_ptr.vmem [resolvable:$true] %s26
      %32 = dma.hbm_to_vmem [thread:$0]  %s1, 2048, %s27, [#allocation6], 512, 512, 32
    $region9: #{tpu_custom_call.1} parent=1 // pred_fallthru
      _
    // Predicated region
    $region10: #{tpu_custom_call.1} parent=1 // pred_check
      _
    $region11: #{tpu_custom_call.1} parent=1 // pred_check_branch
      %34 = sbr.rel (0) target = $region13
    $region12: #{tpu_custom_call.1} parent=1 // pred_region
      _
    $region13: #{tpu_custom_call.1} parent=1 // pred_fallthru
      _
    // Predicated region
    $region14: #{tpu_custom_call.1} parent=1 // pred_check
      _
    $region15: #{tpu_custom_call.1} parent=1 // pred_check_branch
      %36 = sbr.rel (0) target = $region17
    $region16: #{tpu_custom_call.1} parent=1 // pred_region
      %37 = dma.done [#allocation3], 128
    $region17: #{tpu_custom_call.1} parent=1 // pred_fallthru
      _
    // Predicated region
    $region18: #{tpu_custom_call.1} parent=1 // pred_check
      _
    $region19: #{tpu_custom_call.1} parent=1 // pred_check_branch
      %39 = sbr.rel (0) target = $region21
    $region20: #{tpu_custom_call.1} parent=1 // pred_region
      %40 = dma.done [#allocation6], 2048
    $region21: #{tpu_custom_call.1} parent=1 // pred_fallthru
      _
    %v41 = vld [vmem:[#allocation2] sm:$0xff]
    %v42 = vld [vmem:[#allocation5] sm:$0xff]
    %v43 = vld [vmem:[#allocation5 + $0x8] sm:$0xff]
    %v44 = vld [vmem:[#allocation5 + $0x10] sm:$0xff]
    %v45 = vld [vmem:[#allocation5 + $0x18] sm:$0xff]
    %v46 = vld [vmem:[#allocation5 + $0x20] sm:$0xff]
    %v47 = vld [vmem:[#allocation5 + $0x28] sm:$0xff]
    %v48 = vld [vmem:[#allocation5 + $0x30] sm:$0xff]
    %v49 = vld [vmem:[#allocation5 + $0x38] sm:$0xff]
    %v50 = vld [vmem:[#allocation5 + $0x40] sm:$0xff]
    %v51 = vld [vmem:[#allocation5 + $0x48] sm:$0xff]
    %v52 = vld [vmem:[#allocation5 + $0x50] sm:$0xff]
    %v53 = vld [vmem:[#allocation5 + $0x58] sm:$0xff]
    %v54 = vld [vmem:[#allocation5 + $0x60] sm:$0xff]
    %v55 = vld [vmem:[#allocation5 + $0x68] sm:$0xff]
    %v56 = vld [vmem:[#allocation5 + $0x70] sm:$0xff]
    %v57 = vld [vmem:[#allocation5 + $0x78] sm:$0xff]
    %v58 = vld [vmem:[%s2] sm:$0xf]
    %v60 = vlaneseq
    %v61 = vshrl.u32 %v60, 7
    %v62 = vsub.s32 0, %v61
    %v63 = vrot.slane %v58, %v62
    %v64 = vlaneseq
    %v65 = vshrl.u32 %v64, 7
    %v66 = vsub.s32 1, %v65
    %v67 = vrot.slane %v58, %v66
    %v68 = vlaneseq
    %v69 = vshrl.u32 %v68, 7
    %v70 = vsub.s32 2, %v69
    %v71 = vrot.slane %v58, %v70
    %v72 = vlaneseq
    %v73 = vshrl.u32 %v72, 7
    %v74 = vsub.s32 3, %v73
    %v75 = vrot.slane %v58, %v74
    %vm80 = vcmask 261120
    %v82 = vsel %vm80, %v41, 0
    %84 = vmatprep.subr.mxu0 %v43
    %85 = vmatpush1.msra.mxu0 %v42
    %86 = vmatprep.subr.mxu0 %v47
    %87 = vmatpush1.msra.mxu0 %v46
    %88 = vmatprep.subr.mxu0 %v51
    %89 = vmatpush1.msra.mxu0 %v50
    %90 = vmatprep.subr.mxu0 %v55
    %91 = vmatpush1.msra.mxu0 %v54
    %92 = vmatprep.subr.mxu0 0.0
    %93 = vmatpush1.msra.mxu0 0.0
    %94 = vmatprep.subr.mxu0 0.0
    %95 = vmatpush1.msra.mxu0 0.0
    %96 = vmatprep.subr.mxu0 0.0
    %97 = vmatpush1.msra.mxu0 0.0
    %98 = vmatprep.subr.mxu0 0.0
    %99 = vmatpush1.msra.mxu0 0.0
    %100 = vmatprep.subr.mxu0 0.0
    %101 = vmatpush1.msra.mxu0 0.0
    %102 = vmatprep.subr.mxu0 0.0
    %103 = vmatpush1.msra.mxu0 0.0
    %104 = vmatprep.subr.mxu0 0.0
    %105 = vmatpush1.msra.mxu0 0.0
    %106 = vmatprep.subr.mxu0 0.0
    %107 = vmatpush1.msra.mxu0 0.0
    %108 = vmatprep.subr.mxu0 0.0
    %109 = vmatpush1.msra.mxu0 0.0
    %110 = vmatprep.subr.mxu0 0.0
    %111 = vmatpush1.msra.mxu0 0.0
    %112 = vmatprep.subr.mxu0 0.0
    %113 = vmatpush1.msra.mxu0 0.0
    %114 = vmatprep.subr.mxu0 0.0
    %115 = vmatpush1.msra.mxu0 0.0
    %116 = vmatprep.subr.mxu0 0.0
    %117 = vmatpush1.msra.mxu0 0.0
    %118 = vmatprep.subr.mxu0 0.0
    %119 = vmatpush1.msra.mxu0 0.0
    %120 = vmatprep.subr.mxu0 0.0
    %121 = vmatpush1.msra.mxu0 0.0
    %122 = vmatprep.subr.mxu0 0.0
    %123 = vmatpush1.msra.mxu0 0.0
    %124 = vmatprep.subr.mxu0 0.0
    %125 = vmatpush1.msra.mxu0 0.0
    %126 = vmatprep.subr.mxu0 0.0
    %127 = vmatpush1.msra.mxu0 0.0
    %128 = vmatprep.subr.mxu0 0.0
    %129 = vmatpush1.msra.mxu0 0.0
    %130 = vmatprep.subr.mxu0 0.0
    %131 = vmatpush1.msra.mxu0 0.0
    %132 = vmatprep.subr.mxu0 0.0
    %133 = vmatpush1.msra.mxu0 0.0
    %134 = vmatprep.subr.mxu0 0.0
    %135 = vmatpush1.msra.mxu0 0.0
    %136 = vmatprep.subr.mxu0 0.0
    %137 = vmatpush1.msra.mxu0 0.0
    %138 = vmatprep.subr.mxu0 0.0
    %139 = vmatpush1.msra.mxu0 0.0
    %140 = vmatprep.subr.mxu0 0.0
    %141 = vmatpush1.msra.mxu0 0.0
    %142 = vmatprep.subr.mxu0 0.0
    %143 = vmatpush1.msra.mxu0 0.0
    %144 = vmatprep.subr.mxu0 0.0
    %145 = vmatpush1.msra.mxu0 0.0
    %146 = vmatprep.subr.mxu0 0.0
    %147 = vmatpush1.msra.mxu0 0.0
    %148 = vmatprep.mubr.f32.mxu0 0.0
    %149 = vmatmul.mubr.f32.gmra.mrb[0].mxu0 %v82
    %v150 = vpop.f32.mrb[0].mxu0
    %v151 = vadd.f32 %v63, %v150
    %v152 = vpop.f32.mrb[0].mxu0
    %v153 = vadd.f32 %v67, %v152
    %154 = vdwg.mxu0
    %155 = vmatprep.subr.mxu0 %v45
    %156 = vmatpush1.msra.mxu0 %v44
    %157 = vmatprep.subr.mxu0 %v49
    %158 = vmatpush1.msra.mxu0 %v48
    %159 = vmatprep.subr.mxu0 %v53
    %160 = vmatpush1.msra.mxu0 %v52
    %161 = vmatprep.subr.mxu0 %v57
    %162 = vmatpush1.msra.mxu0 %v56
    %163 = vmatprep.subr.mxu0 0.0
    %164 = vmatpush1.msra.mxu0 0.0
    %165 = vmatprep.subr.mxu0 0.0
    %166 = vmatpush1.msra.mxu0 0.0
    %167 = vmatprep.subr.mxu0 0.0
    %168 = vmatpush1.msra.mxu0 0.0
    %169 = vmatprep.subr.mxu0 0.0
    %170 = vmatpush1.msra.mxu0 0.0
    %171 = vmatprep.subr.mxu0 0.0
    %172 = vmatpush1.msra.mxu0 0.0
    %173 = vmatprep.subr.mxu0 0.0
    %174 = vmatpush1.msra.mxu0 0.0
    %175 = vmatprep.subr.mxu0 0.0
    %176 = vmatpush1.msra.mxu0 0.0
    %177 = vmatprep.subr.mxu0 0.0
    %178 = vmatpush1.msra.mxu0 0.0
    %179 = vmatprep.subr.mxu0 0.0
    %180 = vmatpush1.msra.mxu0 0.0
    %181 = vmatprep.subr.mxu0 0.0
    %182 = vmatpush1.msra.mxu0 0.0
    %183 = vmatprep.subr.mxu0 0.0
    %184 = vmatpush1.msra.mxu0 0.0
    %185 = vmatprep.subr.mxu0 0.0
    %186 = vmatpush1.msra.mxu0 0.0
    %187 = vmatprep.subr.mxu0 0.0
    %188 = vmatpush1.msra.mxu0 0.0
    %189 = vmatprep.subr.mxu0 0.0
    %190 = vmatpush1.msra.mxu0 0.0
    %191 = vmatprep.subr.mxu0 0.0
    %192 = vmatpush1.msra.mxu0 0.0
    %193 = vmatprep.subr.mxu0 0.0
    %194 = vmatpush1.msra.mxu0 0.0
    %195 = vmatprep.subr.mxu0 0.0
    %196 = vmatpush1.msra.mxu0 0.0
    %197 = vmatprep.subr.mxu0 0.0
    %198 = vmatpush1.msra.mxu0 0.0
    %199 = vmatprep.subr.mxu0 0.0
    %200 = vmatpush1.msra.mxu0 0.0
    %201 = vmatprep.subr.mxu0 0.0
    %202 = vmatpush1.msra.mxu0 0.0
    %203 = vmatprep.subr.mxu0 0.0
    %204 = vmatpush1.msra.mxu0 0.0
    %205 = vmatprep.subr.mxu0 0.0
    %206 = vmatpush1.msra.mxu0 0.0
    %207 = vmatprep.subr.mxu0 0.0
    %208 = vmatpush1.msra.mxu0 0.0
    %209 = vmatprep.subr.mxu0 0.0
    %210 = vmatpush1.msra.mxu0 0.0
    %211 = vmatprep.subr.mxu0 0.0
    %212 = vmatpush1.msra.mxu0 0.0
    %213 = vmatprep.subr.mxu0 0.0
    %214 = vmatpush1.msra.mxu0 0.0
    %215 = vmatprep.subr.mxu0 0.0
    %216 = vmatpush1.msra.mxu0 0.0
    %217 = vmatprep.subr.mxu0 0.0
    %218 = vmatpush1.msra.mxu0 0.0
    %219 = vmatprep.mubr.f32.mxu0 0.0
    %220 = vmatmul.mubr.f32.gmra.mrb[0].mxu0 %v82
    %v221 = vpop.f32.mrb[0].mxu0
    %v222 = vadd.f32 %v71, %v221
    %v223 = vpop.f32.mrb[0].mxu0
    %v224 = vadd.f32 %v75, %v223
    %225 = vdwg.mxu0
    %v226 = vadd.f32 %v151, %v153
    %v227 = vadd.f32 %v226, %v222
    %v228 = vadd.f32 %v227, %v224
    %p229 = scmp.eq.s32.totalorder 0, 0
    // Predicated region
    $region22: #{tpu_custom_call.1} parent=1 // pred_check
      %p230 = pneg %p229
    $region23: #{tpu_custom_call.1} parent=1 // pred_check_branch
      %232 = sbr.rel (%p230) target = $region25
    $region24: #{tpu_custom_call.1} parent=1 // pred_region
      %233 = vst [vmem:[#allocation7] sm:$0xff] %v228
    $region25: #{tpu_custom_call.1} parent=1 // pred_fallthru
      _
    %p234 = scmp.ne.s32.totalorder 0, 0
    // Predicated region
    $region26: #{tpu_custom_call.1} parent=1 // pred_check
      %p235 = pneg %p234
    $region27: #{tpu_custom_call.1} parent=1 // pred_check_branch
      %237 = sbr.rel (%p235) target = $region29
    $region28: #{tpu_custom_call.1} parent=1 // pred_region
      %v238 = vld [vmem:[#allocation7] sm:$0xff]
      %v239 = vadd.f32 %v238, %v228
      %240 = vst [vmem:[#allocation7] sm:$0xff] %v239
    $region29: #{tpu_custom_call.1} parent=1 // pred_fallthru
      _
    // Predicated region
    $region30: #{tpu_custom_call.1} parent=1 // pred_check
      %p241 = pneg %p229
    $region31: #{tpu_custom_call.1} parent=1 // pred_check_branch
      %243 = sbr.rel (%p241) target = $region33
    $region32: #{tpu_custom_call.1} parent=1 // pred_region
      %v244 = vld [vmem:[#allocation7] sm:$0xff]
      %v245 = vmul.f32 %v244, 0.25
      %246 = vst [vmem:[#allocation7] sm:$0xff] %v245
    $region33: #{tpu_custom_call.1} parent=1 // pred_fallthru
      _
    // Predicated region
    $region34: #{tpu_custom_call.1} parent=1 // pred_check
      _
    $region35: #{tpu_custom_call.1} parent=1 // pred_check_branch
      %248 = sbr.rel (0) target = $region37
    $region36: #{tpu_custom_call.1} parent=1 // pred_region
      %s250 = ssub.s32 128, 128
      %251 = vsyncadd [#allocation4], %s250
      %s253 = sshll.u32 [#allocation7], 4
      %s254 = int_to_ptr.vmem [resolvable:$true] %s253
      %256 = dma.vmem_to_hbm [thread:$0]  %s254, 128, %s3, [#allocation4]
    $region37: #{tpu_custom_call.1} parent=1 // pred_fallthru
      _
    // Predicated region
    $region38: #{tpu_custom_call.1} parent=1 // pred_check
      _
    $region39: #{tpu_custom_call.1} parent=1 // pred_check_branch
      %258 = sbr.rel (0) target = $region41
    $region40: #{tpu_custom_call.1} parent=1 // pred_region
      %259 = dma.done [#allocation4], 128
    $region41: #{tpu_custom_call.1} parent=1 // pred_fallthru
      _
    %260 = vsyncpa [#allocation3], 1
    %261 = vsyncpa [#allocation6], 1
    %262 = vsyncpa [#allocation4], 1

</llo_original>
